<compile_context>
chip_gen: v6e
topology: v6e:2x2x1
jax: 0.10.0
libtpu: 0.0.40
codegen_flags: <defaults>
</compile_context>

<pallas_src>
from typing import NamedTuple

import jax
import jax.numpy as jnp
from jax.experimental import pallas as pl
from jax.experimental.pallas import tpu as pltpu

# ---------------------------------------------------------------------------
# Tile defaults.
#   A_hat @ XW (dominant, HBM-bound): tm=512 node rows, tk=1024 contraction,
#   tn up to 256 (full 256-wide MXU passes on v6e/v7x).
#   X @ W (small projection): 256 x 512 tiles.
TILE_M_ADJ = 512
TILE_K_ADJ = 1024
TILE_M_XW = 256
TILE_K_XW = 512
TILE_N_MAX = 256

VMEM_LIMIT = 32 * 1024 * 1024   # fits every generation incl. v7x (64 MiB phys)


def _round_up(x, m):
    return ((x + m - 1) // m) * m


def _pad_to(x, rows, cols, dtype=None):
    if dtype is not None:
        x = x.astype(dtype)
    r, c = x.shape
    if r == rows and c == cols:
        return x
    return jnp.pad(x, ((0, rows - r), (0, cols - c)))


# ---------------------------------------------------------------------------
# Kernels
# ---------------------------------------------------------------------------
def _matmul_kernel(x_ref, y_ref, o_ref, acc_ref):
    """o = x @ y  (f32 VMEM accumulator over the k grid axis)."""
    @pl.when(pl.program_id(2) == 0)
    def _():
        acc_ref[...] = jnp.zeros_like(acc_ref)

    acc_ref[...] += jnp.dot(x_ref[...], y_ref[...],
                            preferred_element_type=jnp.float32)

    @pl.when(pl.program_id(2) == pl.num_programs(2) - 1)
    def _():
        o_ref[...] = acc_ref[...].astype(o_ref.dtype)


def _matmul_bias_relu_kernel(x_ref, y_ref, b_ref, o_ref):
    """o = relu(x @ y + b), accumulating directly into the resident f32 output
    block (no extra scratch); bias + ReLU fused on the final k step."""
    @pl.when(pl.program_id(2) == 0)
    def _():
        o_ref[...] = jnp.zeros_like(o_ref)

    o_ref[...] += jnp.dot(x_ref[...], y_ref[...],
                          preferred_element_type=jnp.float32)

    @pl.when(pl.program_id(2) == pl.num_programs(2) - 1)
    def _():
        o_ref[...] = jnp.maximum(o_ref[...] + b_ref[...], 0.0)


def _matmul_padded(xp, yp, bias_p=None, *, tm, tn, tk, out_dtype=jnp.float32):
    """Tiled Pallas matmul on already-padded operands.

    xp: (Mp, Kp), yp: (Kp, Np); Mp % tm == Np % tn == Kp % tk == 0.
    If bias_p (1, Np) is given, bias + ReLU are fused and out_dtype is f32.
    """
    Mp, Kp = xp.shape
    Kp2, Np = yp.shape
    assert Kp == Kp2
    assert Mp % tm == 0 and Np % tn == 0 and Kp % tk == 0

    grid = (Mp // tm, Np // tn, Kp // tk)

    in_specs = [
        pl.BlockSpec((tm, tk), lambda i, j, k: (i, k)),
        pl.BlockSpec((tk, tn), lambda i, j, k: (k, j)),
    ]
    operands = [xp, yp]
    bytes_accessed = (xp.size * xp.dtype.itemsize
                      + yp.size * yp.dtype.itemsize
                      + Mp * Np * jnp.dtype(out_dtype).itemsize)

    if bias_p is not None:
        in_specs.append(pl.BlockSpec((1, tn), lambda i, j, k: (0, j)))
        operands.append(bias_p)
        bytes_accessed += bias_p.size * bias_p.dtype.itemsize
        kernel = _matmul_bias_relu_kernel
        scratch_shapes = []                    # accumulate in the output block
    else:
        kernel = _matmul_kernel
        scratch_shapes = [pltpu.VMEM((tm, tn), jnp.float32)]

    return pl.pallas_call(
        kernel,
        out_shape=jax.ShapeDtypeStruct((Mp, Np), out_dtype),
        grid=grid,
        in_specs=in_specs,
        out_specs=pl.BlockSpec((tm, tn), lambda i, j, k: (i, j)),
        scratch_shapes=scratch_shapes,
        compiler_params=pltpu.CompilerParams(
            dimension_semantics=("parallel", "parallel", "arbitrary"),
            vmem_limit_bytes=VMEM_LIMIT),
        cost_estimate=pl.CostEstimate(
            flops=2 * Mp * Np * Kp,
            transcendentals=0,
            bytes_accessed=int(bytes_accessed)),
    )(*operands)


# ---------------------------------------------------------------------------
# Encoder building blocks
# ---------------------------------------------------------------------------
class PreparedAdjacency(NamedTuple):
    data: jax.Array   # (Mp, Kp) compute-dtype, zero-padded normalized A_hat
    n: int            # number of nodes
    tm: int           # node-row tile for the A_hat matmul
    tk: int           # contraction tile for the A_hat matmul


def prepare_adjacency(a_hat, *, tm=TILE_M_ADJ, tk=TILE_K_ADJ,
                      compute_dtype=jnp.bfloat16):
    """Cast + pad A_hat once; reuse across clean/corrupt passes and steps."""
    n = a_hat.shape[0]
    tm = min(tm, _round_up(n, 8))
    tk = min(tk, _round_up(n, 128))
    mp, kp = _round_up(n, tm), _round_up(n, tk)
    data = _pad_to(a_hat, mp, kp, compute_dtype)
    return PreparedAdjacency(data=data, n=n, tm=tm, tk=tk)


def _project_features(features, w, *, compute_dtype=jnp.bfloat16):
    """XW = X @ W (small matmul; bf16 output feeds the A_hat stage)."""
    n, f = features.shape
    h = w.shape[1]
    tm = min(TILE_M_XW, _round_up(n, 8))
    tn = min(TILE_N_MAX, _round_up(h, 128))
    tk = min(TILE_K_XW, _round_up(f, 128))
    xp = _pad_to(features, _round_up(n, tm), _round_up(f, tk), compute_dtype)
    yp = _pad_to(w, _round_up(f, tk), _round_up(h, tn), compute_dtype)
    out = _matmul_padded(xp, yp, tm=tm, tn=tn, tk=tk, out_dtype=compute_dtype)
    return out[:n, :h]


def _aggregate(adj: PreparedAdjacency, xw, bias, *,
               compute_dtype=jnp.bfloat16):
    """relu(A_hat @ XW + b) with big tiles and in-place f32 accumulation."""
    n, h = xw.shape
    assert n == adj.n
    tn = min(TILE_N_MAX, _round_up(h, 128))
    kp = adj.data.shape[1]
    hp = _round_up(h, tn)
    xwp = _pad_to(xw, kp, hp, compute_dtype)
    bp = _pad_to(bias.reshape(1, -1), 1, hp, jnp.float32)
    out = _matmul_padded(adj.data, xwp, bp, tm=adj.tm, tn=tn, tk=adj.tk,
                         out_dtype=jnp.float32)
    return out[:n, :h]


def encoder_forward(adj, features, w, b, corrupt=False, key=None,
                    compute_dtype=jnp.bfloat16):
    """DGI Encoder forward (module parity): optional node permutation, then
    a single-layer GCN  relu(A_hat @ X @ W + b)."""
    if not isinstance(adj, PreparedAdjacency):
        adj = prepare_adjacency(adj, compute_dtype=compute_dtype)
    if corrupt:
        perm = jax.random.permutation(key, features.shape[0])
        features = features[perm]
    xw = _project_features(features, w, compute_dtype=compute_dtype)
    return _aggregate(adj, xw, b, compute_dtype=compute_dtype)


def encoder_forward_pair(adj, features, w, b, key,
                         compute_dtype=jnp.bfloat16):
    """Fused clean + corrupted DGI passes.

    (P X) W == P (X W), so the projection runs once and the corrupted XW is a
    row gather; [XW | P XW] (N x 2H) is aggregated in ONE A_hat matmul, so the
    dominant N^2 HBM stream is read once instead of twice.
    """
    if not isinstance(adj, PreparedAdjacency):
        adj = prepare_adjacency(adj, compute_dtype=compute_dtype)
    n = features.shape[0]
    h = w.shape[1]
    perm = jax.random.permutation(key, n)
    xw = _project_features(features, w, compute_dtype=compute_dtype)
    xw2 = jnp.concatenate([xw, jnp.take(xw, perm, axis=0)], axis=1)
    b2 = jnp.concatenate([b.reshape(1, -1), b.reshape(1, -1)], axis=1)
    out = _aggregate(adj, xw2, b2, compute_dtype=compute_dtype)
    return out[:, :h], out[:, h:]


# ---------------------------------------------------------------------------
# Helpers for the self-test
# ---------------------------------------------------------------------------
def build_normalized_adjacency(key, n_nodes):
    """Deterministic synthetic graph:  A_hat = D^-1/2 (A + I) D^-1/2."""
    probs = jax.random.uniform(key, (n_nodes, n_nodes))
    a = (probs < 0.3).astype(jnp.float32)
    a = jnp.maximum(a, a.T)                      # symmetric
    a = jnp.maximum(a, jnp.eye(n_nodes))         # self-loops
    deg = jnp.sum(a, axis=1)
    d_inv_sqrt = 1.0 / jnp.sqrt(deg)
    return a * d_inv_sqrt[:, None] * d_inv_sqrt[None, :]


def _reference_gcn(a_hat, x, w, b, compute_dtype):
    """Plain-JAX reference mirroring the kernel's dtype / ordering choices."""
    def mm(p, q):
        return jnp.dot(p.astype(compute_dtype), q.astype(compute_dtype),
                       preferred_element_type=jnp.float32)
    h = mm(a_hat, mm(x, w).astype(compute_dtype))
    return jnp.maximum(h + b, 0.0)


if __name__ == "__main__":
    # Small, deliberately non-tile-aligned shapes: nodes, in_feats, n_hidden.
    N_NODES, IN_FEATS, N_HIDDEN = 200, 96, 32

    key = jax.random.PRNGKey(0)
    k_adj, k_feat, k_w, k_perm = jax.random.split(key, 4)

    a_hat = build_normalized_adjacency(k_adj, N_NODES)
    features = jax.random.normal(k_feat, (N_NODES, IN_FEATS), dtype=jnp.float32)

    # Glorot-uniform weight (as DGL GraphConv), zero bias.
    limit = (6.0 / (IN_FEATS + N_HIDDEN)) ** 0.5
    w = jax.random.uniform(k_w, (IN_FEATS, N_HIDDEN), minval=-limit,
                           maxval=limit, dtype=jnp.float32)
    b = jnp.zeros((1, N_HIDDEN), dtype=jnp.float32)

    # Cast + pad A_hat once; reused by every call below.
    adj = prepare_adjacency(a_hat)

    # Module-parity single passes (Encoder(features, corrupt=False/True)).
    out_clean = encoder_forward(adj, features, w, b, corrupt=False)
    out_corrupt = encoder_forward(adj, features, w, b, corrupt=True, key=k_perm)
    out_clean, out_corrupt = jax.block_until_ready((out_clean, out_corrupt))

    # Fused clean+corrupt pass (single read of the A_hat stream).
    pair_clean, pair_corrupt = encoder_forward_pair(adj, features, w, b,
                                                    key=k_perm)
    pair_clean, pair_corrupt = jax.block_until_ready((pair_clean, pair_corrupt))

    assert out_clean.shape == (N_NODES, N_HIDDEN)
    assert out_corrupt.shape == (N_NODES, N_HIDDEN)
    assert pair_clean.shape == (N_NODES, N_HIDDEN)
    assert pair_corrupt.shape == (N_NODES, N_HIDDEN)

    # Fused pass must match the separate passes (same numerics).
    assert jnp.allclose(pair_clean, out_clean, atol=1e-5, rtol=1e-5)
    assert jnp.allclose(pair_corrupt, out_corrupt, atol=1e-5, rtol=1e-5)

    # Tight check vs. a reference mirroring kernel numerics (bf16 MXU inputs,
    # f32 accumulation), plus a loose full-f32 sanity check.
    ref_bf16 = _reference_gcn(a_hat, features, w, b, jnp.bfloat16)
    ref_f32 = jnp.maximum(a_hat @ features @ w + b, 0.0)
    assert jnp.allclose(out_clean, ref_bf16, atol=2e-3, rtol=2e-3)
    assert jnp.allclose(out_clean, ref_f32, atol=3e-2, rtol=3e-2)

    # Corrupted pass vs. full-f32 reference using the same permutation.
    perm = jax.random.permutation(k_perm, N_NODES)
    ref_corrupt_f32 = jnp.maximum(a_hat @ features[perm] @ w + b, 0.0)
    assert jnp.allclose(out_corrupt, ref_corrupt_f32, atol=3e-2, rtol=3e-2)

    print("KERNEL_OK")
</pallas_src>

<mosaic_0001>
module attributes {stable_mosaic.version = 11 : i64} {
  func.func @_matmul_kernel(%arg0: i32, %arg1: i32, %arg2: i32, %arg3: memref<200x128xbf16, #tpu.memory_space<vmem>>, %arg4: memref<128x128xbf16, #tpu.memory_space<vmem>>, %arg5: memref<200x128xbf16, #tpu.memory_space<vmem>>, %arg6: memref<200x128xf32, #tpu.memory_space<vmem>>) attributes {dimension_semantics = [#tpu.dimension_semantics<parallel>, #tpu.dimension_semantics<parallel>, #tpu.dimension_semantics<arbitrary>], iteration_bounds = array<i64: 1, 1, 1>, scalar_prefetch = 0 : i64, scratch_operands = 1 : i64, tpu.core_type = #tpu.core_type<tc>, window_params = [{transform_indices = @transform_0, window_bounds = array<i64: 200, 128>}, {transform_indices = @transform_1, window_bounds = array<i64: 128, 128>}, {transform_indices = @transform_2, window_bounds = array<i64: 200, 128>}]} {
    %c0_i32 = arith.constant 0 : i32
    %0 = arith.cmpi eq, %arg2, %c0_i32 : i32
    %1 = arith.extui %0 : i1 to i32
    %c0_i32_0 = arith.constant 0 : i32
    %2 = arith.cmpi ne, %1, %c0_i32_0 : i32
    scf.if %2 {
      %cst_10 = arith.constant 0.000000e+00 : f32
      %12 = vector.broadcast %cst_10 : f32 to vector<200x128xf32>
      %c0_11 = arith.constant 0 : index
      %c0_12 = arith.constant 0 : index
      %13 = vector.load %arg6[%c0_11, %c0_12] : memref<200x128xf32, #tpu.memory_space<vmem>>, vector<200x128xf32>
      tpu.vector_store %arg6[%c0_11, %c0_12], %12 {strides = array<i32>} : memref<200x128xf32, #tpu.memory_space<vmem>>, vector<200x128xf32>,
    } else {
    }
    %c0 = arith.constant 0 : index
    %c0_1 = arith.constant 0 : index
    %3 = vector.load %arg6[%c0, %c0_1] : memref<200x128xf32, #tpu.memory_space<vmem>>, vector<200x128xf32>
    %c0_2 = arith.constant 0 : index
    %c0_3 = arith.constant 0 : index
    %4 = vector.load %arg3[%c0_2, %c0_3] : memref<200x128xbf16, #tpu.memory_space<vmem>>, vector<200x128xbf16>
    %c0_4 = arith.constant 0 : index
    %c0_5 = arith.constant 0 : index
    %5 = vector.load %arg4[%c0_4, %c0_5] : memref<128x128xbf16, #tpu.memory_space<vmem>>, vector<128x128xbf16>
    %cst = arith.constant dense<0.000000e+00> : vector<200x128xf32>
    %6 = tpu.matmul %4, %5, %cst {dimension_numbers = #tpu.dot_dimension_numbers<[1], [0], [0], [1], [0, 0, 1, 1], [], []>} : vector<200x128xbf16>, vector<128x128xbf16>, vector<200x128xf32> -> vector<200x128xf32>
    %7 = arith.addf %3, %6 : vector<200x128xf32>
    %c0_6 = arith.constant 0 : index
    %c0_7 = arith.constant 0 : index
    %8 = vector.load %arg6[%c0_6, %c0_7] : memref<200x128xf32, #tpu.memory_space<vmem>>, vector<200x128xf32>
    tpu.vector_store %arg6[%c0_6, %c0_7], %7 {strides = array<i32>} : memref<200x128xf32, #tpu.memory_space<vmem>>, vector<200x128xf32>,
    %c0_i32_8 = arith.constant 0 : i32
    %9 = arith.cmpi eq, %arg2, %c0_i32_8 : i32
    %10 = arith.extui %9 : i1 to i32
    %c0_i32_9 = arith.constant 0 : i32
    %11 = arith.cmpi ne, %10, %c0_i32_9 : i32
    scf.if %11 {
      %c0_10 = arith.constant 0 : index
      %c0_11 = arith.constant 0 : index
      %12 = vector.load %arg6[%c0_10, %c0_11] : memref<200x128xf32, #tpu.memory_space<vmem>>, vector<200x128xf32>
      %13 = arith.truncf %12 : vector<200x128xf32> to vector<200x128xbf16>
      %c0_12 = arith.constant 0 : index
      %c0_13 = arith.constant 0 : index
      %14 = vector.load %arg5[%c0_12, %c0_13] : memref<200x128xbf16, #tpu.memory_space<vmem>>, vector<200x128xbf16>
      tpu.vector_store %arg5[%c0_12, %c0_13], %13 {strides = array<i32>} : memref<200x128xbf16, #tpu.memory_space<vmem>>, vector<200x128xbf16>,
    } else {
    }
    return
  }
  func.func @transform_0(%arg0: i32, %arg1: i32, %arg2: i32) -> (i32, i32) {
    %c0_i32 = arith.constant 0 : i32
    return %arg0, %arg2 : i32, i32
  }
  func.func @transform_1(%arg0: i32, %arg1: i32, %arg2: i32) -> (i32, i32) {
    %c0_i32 = arith.constant 0 : i32
    return %arg2, %arg1 : i32, i32
  }
  func.func @transform_2(%arg0: i32, %arg1: i32, %arg2: i32) -> (i32, i32) {
    %c0_i32 = arith.constant 0 : i32
    return %arg0, %arg1 : i32, i32
  }
}

</mosaic_0001>

<llo_original>
// kernel: tpu_custom_call.1
$region0: #{tpu_custom_call.1}
  #allocation0 [shape = 'u32[]', space=smem, size = 0x4, offset = 0x4, fixed_abs, tag = 'smem constant byte address 0x4 - core index']
  #allocation1 [shape = 'u32[144,128]{1,0:T(1,128)}', space=vmem, size = 0x12000, scoped, tag = 'internal scratch']
  #allocation2 [shape = 'f32[200,128]{1,0:T(8,128)}', space=vmem, size = 0x19000, scoped, tag = 'scratch operand']
  %s0 = inlined_call_operand.hbm [shape: bf16[200,128], index: 0, kind: input, shape index: {}]
  %s1 = inlined_call_operand.hbm [shape: bf16[128,128], index: 1, kind: input, shape index: {}]
  %s2 = inlined_call_operand.hbm [shape: bf16[200,128], index: 2, kind: output, shape index: {}]
  %s3 = sld [smem:[#allocation0]]
  $region34: #{tpu_custom_call.1} parent=0
    _
  %s5 = ssub.s32 1, %s3
  %s6 = scalar_select 0, %s5, %s3
  $region1: #{tpu_custom_call.1} parent=0
    #allocation3 [shape = 'u8[51200]{0}', space=vmem, size = 0xc800, scoped, tag = 'input window, operand 0, single buffered']
    #allocation4 [shape = 's32[1]{0}', space=sflag, size = 0x4, scoped, tag = 'scoped memory for tpu_custom_call.1']
    #allocation5 [shape = 's32[1]{0}', space=sflag, size = 0x4, scoped, tag = 'scoped memory for tpu_custom_call.1']
    #allocation6 [shape = 'u8[32768]{0}', space=vmem, size = 0x8000, scoped, tag = 'input window, operand 1, single buffered']
    #allocation7 [shape = 's32[1]{0}', space=sflag, size = 0x4, scoped, tag = 'scoped memory for tpu_custom_call.1']
    #allocation8 [shape = 'u8[51200]{0}', space=vmem, size = 0xc800, scoped, tag = 'output window, operand 0, single buffered']
    %7 = vsyncpa [#allocation4], 0
    %8 = vsyncpa [#allocation7], 0
    %9 = vsyncpa [#allocation5], 0
    // Predicated region
    $region2: #{tpu_custom_call.1} parent=1 // pred_check
      _
    $region3: #{tpu_custom_call.1} parent=1 // pred_check_branch
      %11 = sbr.rel (0) target = $region5
    $region4: #{tpu_custom_call.1} parent=1 // pred_region
      %s13 = ssub.s32 1600, 1600
      %14 = vsyncadd [#allocation4], %s13
      %s15 = sshll.u32 [#allocation3], 4
      %s16 = int_to_ptr.vmem [resolvable:$true] %s15
      %21 = dma.hbm_to_vmem [thread:$0]  %s0, 1600, %s16, [#allocation4], 64, 64, 4
    $region5: #{tpu_custom_call.1} parent=1 // pred_fallthru
      _
    // Predicated region
    $region6: #{tpu_custom_call.1} parent=1 // pred_check
      _
    $region7: #{tpu_custom_call.1} parent=1 // pred_check_branch
      %23 = sbr.rel (0) target = $region9
    $region8: #{tpu_custom_call.1} parent=1 // pred_region
      %s25 = ssub.s32 1024, 1024
      %26 = vsyncadd [#allocation7], %s25
      %s27 = sshll.u32 [#allocation6], 4
      %s28 = int_to_ptr.vmem [resolvable:$true] %s27
      %33 = dma.hbm_to_vmem [thread:$0]  %s1, 1024, %s28, [#allocation7], 64, 64, 4
    $region9: #{tpu_custom_call.1} parent=1 // pred_fallthru
      _
    // Predicated region
    $region10: #{tpu_custom_call.1} parent=1 // pred_check
      _
    $region11: #{tpu_custom_call.1} parent=1 // pred_check_branch
      %35 = sbr.rel (0) target = $region13
    $region12: #{tpu_custom_call.1} parent=1 // pred_region
      %36 = dma.done [#allocation4], 1600
    $region13: #{tpu_custom_call.1} parent=1 // pred_fallthru
      _
    // Predicated region
    $region14: #{tpu_custom_call.1} parent=1 // pred_check
      _
    $region15: #{tpu_custom_call.1} parent=1 // pred_check_branch
      %38 = sbr.rel (0) target = $region17
    $region16: #{tpu_custom_call.1} parent=1 // pred_region
      %39 = dma.done [#allocation7], 1024
    $region17: #{tpu_custom_call.1} parent=1 // pred_fallthru
      _
    %p41 = scmp.eq.s32.totalorder 0, 0
    // Predicated region
    $region18: #{tpu_custom_call.1} parent=1 // pred_check
      %p42 = pneg %p41
    $region19: #{tpu_custom_call.1} parent=1 // pred_check_branch
      %44 = sbr.rel (%p42) target = $region21
    $region20: #{tpu_custom_call.1} parent=1 // pred_region
      %45 = vst [vmem:[#allocation2] sm:$0xff] 0.0
      %46 = vst [vmem:[#allocation2 + $0x8] sm:$0xff] 0.0
      %47 = vst [vmem:[#allocation2 + $0x10] sm:$0xff] 0.0
      %48 = vst [vmem:[#allocation2 + $0x18] sm:$0xff] 0.0
      %49 = vst [vmem:[#allocation2 + $0x20] sm:$0xff] 0.0
      %50 = vst [vmem:[#allocation2 + $0x28] sm:$0xff] 0.0
      %51 = vst [vmem:[#allocation2 + $0x30] sm:$0xff] 0.0
      %52 = vst [vmem:[#allocation2 + $0x38] sm:$0xff] 0.0
      %53 = vst [vmem:[#allocation2 + $0x40] sm:$0xff] 0.0
      %54 = vst [vmem:[#allocation2 + $0x48] sm:$0xff] 0.0
      %55 = vst [vmem:[#allocation2 + $0x50] sm:$0xff] 0.0
      %56 = vst [vmem:[#allocation2 + $0x58] sm:$0xff] 0.0
      %57 = vst [vmem:[#allocation2 + $0x60] sm:$0xff] 0.0
      %58 = vst [vmem:[#allocation2 + $0x68] sm:$0xff] 0.0
      %59 = vst [vmem:[#allocation2 + $0x70] sm:$0xff] 0.0
      %60 = vst [vmem:[#allocation2 + $0x78] sm:$0xff] 0.0
      %61 = vst [vmem:[#allocation2 + $0x80] sm:$0xff] 0.0
      %62 = vst [vmem:[#allocation2 + $0x88] sm:$0xff] 0.0
      %63 = vst [vmem:[#allocation2 + $0x90] sm:$0xff] 0.0
      %64 = vst [vmem:[#allocation2 + $0x98] sm:$0xff] 0.0
      %65 = vst [vmem:[#allocation2 + $0xa0] sm:$0xff] 0.0
      %66 = vst [vmem:[#allocation2 + $0xa8] sm:$0xff] 0.0
      %67 = vst [vmem:[#allocation2 + $0xb0] sm:$0xff] 0.0
      %68 = vst [vmem:[#allocation2 + $0xb8] sm:$0xff] 0.0
      %69 = vst [vmem:[#allocation2 + $0xc0] sm:$0xff] 0.0
    $region21: #{tpu_custom_call.1} parent=1 // pred_fallthru
      _
    %v70 = vld [vmem:[#allocation2] sm:$0xff]
    %v71 = vld [vmem:[#allocation2 + $0x8] sm:$0xff]
    %v72 = vld [vmem:[#allocation2 + $0x10] sm:$0xff]
    %v73 = vld [vmem:[#allocation2 + $0x18] sm:$0xff]
    %v74 = vld [vmem:[#allocation2 + $0x20] sm:$0xff]
    %v75 = vld [vmem:[#allocation2 + $0x28] sm:$0xff]
    %v76 = vld [vmem:[#allocation2 + $0x30] sm:$0xff]
    %v77 = vld [vmem:[#allocation2 + $0x38] sm:$0xff]
    %v78 = vld [vmem:[#allocation2 + $0x40] sm:$0xff]
    %v79 = vld [vmem:[#allocation2 + $0x48] sm:$0xff]
    %v80 = vld [vmem:[#allocation2 + $0x50] sm:$0xff]
    %v81 = vld [vmem:[#allocation2 + $0x58] sm:$0xff]
    %v82 = vld [vmem:[#allocation2 + $0x60] sm:$0xff]
    %v83 = vld [vmem:[#allocation2 + $0x68] sm:$0xff]
    %v84 = vld [vmem:[#allocation2 + $0x70] sm:$0xff]
    %v85 = vld [vmem:[#allocation2 + $0x78] sm:$0xff]
    %v86 = vld [vmem:[#allocation2 + $0x80] sm:$0xff]
    %v87 = vld [vmem:[#allocation2 + $0x88] sm:$0xff]
    %v88 = vld [vmem:[#allocation2 + $0x90] sm:$0xff]
    %v89 = vld [vmem:[#allocation2 + $0x98] sm:$0xff]
    %v90 = vld [vmem:[#allocation2 + $0xa0] sm:$0xff]
    %v91 = vld [vmem:[#allocation2 + $0xa8] sm:$0xff]
    %v92 = vld [vmem:[#allocation2 + $0xb0] sm:$0xff]
    %v93 = vld [vmem:[#allocation2 + $0xb8] sm:$0xff]
    %v94 = vld [vmem:[#allocation2 + $0xc0] sm:$0xff]
    %v95 = vld [vmem:[#allocation3] sm:$0xf]
    %v96 = vld [vmem:[#allocation3 + $0x4] sm:$0xf]
    %v97 = vld [vmem:[#allocation3 + $0x8] sm:$0xf]
    %v98 = vld [vmem:[#allocation3 + $0xc] sm:$0xf]
    %v99 = vld [vmem:[#allocation3 + $0x10] sm:$0xf]
    %v100 = vld [vmem:[#allocation3 + $0x14] sm:$0xf]
    %v101 = vld [vmem:[#allocation3 + $0x18] sm:$0xf]
    %v102 = vld [vmem:[#allocation3 + $0x1c] sm:$0xf]
    %v103 = vld [vmem:[#allocation3 + $0x20] sm:$0xf]
    %v104 = vld [vmem:[#allocation3 + $0x24] sm:$0xf]
    %v105 = vld [vmem:[#allocation3 + $0x28] sm:$0xf]
    %v106 = vld [vmem:[#allocation3 + $0x2c] sm:$0xf]
    %v107 = vld [vmem:[#allocation3 + $0x30] sm:$0xf]
    %v108 = vld [vmem:[#allocation3 + $0x34] sm:$0xf]
    %v109 = vld [vmem:[#allocation3 + $0x38] sm:$0xf]
    %v110 = vld [vmem:[#allocation3 + $0x3c] sm:$0xf]
    %v111 = vld [vmem:[#allocation3 + $0x40] sm:$0xf]
    %v112 = vld [vmem:[#allocation3 + $0x44] sm:$0xf]
    %v113 = vld [vmem:[#allocation3 + $0x48] sm:$0xf]
    %v114 = vld [vmem:[#allocation3 + $0x4c] sm:$0xf]
    %v115 = vld [vmem:[#allocation3 + $0x50] sm:$0xf]
    %v116 = vld [vmem:[#allocation3 + $0x54] sm:$0xf]
    %v117 = vld [vmem:[#allocation3 + $0x58] sm:$0xf]
    %v118 = vld [vmem:[#allocation3 + $0x5c] sm:$0xf]
    %v119 = vld [vmem:[#allocation3 + $0x60] sm:$0xf]
    %v120 = vld [vmem:[#allocation6] sm:$0xf]
    %v121 = vld [vmem:[#allocation6 + $0x4] sm:$0xf]
    %v122 = vld [vmem:[#allocation6 + $0x8] sm:$0xf]
    %v123 = vld [vmem:[#allocation6 + $0xc] sm:$0xf]
    %v124 = vld [vmem:[#allocation6 + $0x10] sm:$0xf]
    %v125 = vld [vmem:[#allocation6 + $0x14] sm:$0xf]
    %v126 = vld [vmem:[#allocation6 + $0x18] sm:$0xf]
    %v127 = vld [vmem:[#allocation6 + $0x1c] sm:$0xf]
    %v128 = vld [vmem:[#allocation6 + $0x20] sm:$0xf]
    %v129 = vld [vmem:[#allocation6 + $0x24] sm:$0xf]
    %v130 = vld [vmem:[#allocation6 + $0x28] sm:$0xf]
    %v131 = vld [vmem:[#allocation6 + $0x2c] sm:$0xf]
    %v132 = vld [vmem:[#allocation6 + $0x30] sm:$0xf]
    %v133 = vld [vmem:[#allocation6 + $0x34] sm:$0xf]
    %v134 = vld [vmem:[#allocation6 + $0x38] sm:$0xf]
    %v135 = vld [vmem:[#allocation6 + $0x3c] sm:$0xf]
    %v161 = vunpack.c.l.b16 %v95
    %v162 = vunpack.c.l.b16 %v96
    %v163 = vunpack.c.l.b16 %v97
    %v164 = vunpack.c.l.b16 %v98
    %v165 = vunpack.c.l.b16 %v99
    %v166 = vunpack.c.l.b16 %v100
    %v167 = vunpack.c.l.b16 %v101
    %v168 = vunpack.c.l.b16 %v102
    %v169 = vunpack.c.l.b16 %v103
    %v170 = vunpack.c.l.b16 %v104
    %v171 = vunpack.c.l.b16 %v105
    %v172 = vunpack.c.l.b16 %v106
    %v173 = vunpack.c.l.b16 %v107
    %v174 = vunpack.c.l.b16 %v108
    %v175 = vunpack.c.l.b16 %v109
    %v176 = vunpack.c.l.b16 %v110
    %v177 = vunpack.c.l.b16 %v111
    %v178 = vunpack.c.l.b16 %v112
    %v179 = vunpack.c.l.b16 %v113
    %v180 = vunpack.c.l.b16 %v114
    %v181 = vunpack.c.l.b16 %v115
    %v182 = vunpack.c.l.b16 %v116
    %v183 = vunpack.c.l.b16 %v117
    %v184 = vunpack.c.l.b16 %v118
    %v185 = vunpack.c.l.b16 %v119
    %v186 = vpack.c.b16 %v162, %v161
    %v187 = vpack.c.b16 %v164, %v163
    %v188 = vpack.c.b16 %v166, %v165
    %v189 = vpack.c.b16 %v168, %v167
    %v190 = vpack.c.b16 %v170, %v169
    %v191 = vpack.c.b16 %v172, %v171
    %v192 = vpack.c.b16 %v174, %v173
    %v193 = vpack.c.b16 %v176, %v175
    %v194 = vpack.c.b16 %v178, %v177
    %v195 = vpack.c.b16 %v180, %v179
    %v196 = vpack.c.b16 %v182, %v181
    %v197 = vpack.c.b16 %v184, %v183
    %v198 = vpack.c.b16 %v185, %v185
    %v228 = vunpack.c.l.b16 %v120
    %v229 = vunpack.c.l.b16 %v121
    %v230 = vunpack.c.l.b16 %v122
    %v231 = vunpack.c.l.b16 %v123
    %v232 = vunpack.c.l.b16 %v124
    %v233 = vunpack.c.l.b16 %v125
    %v234 = vunpack.c.l.b16 %v126
    %v235 = vunpack.c.l.b16 %v127
    %v236 = vunpack.c.l.b16 %v128
    %v237 = vunpack.c.l.b16 %v129
    %v238 = vunpack.c.l.b16 %v130
    %v239 = vunpack.c.l.b16 %v131
    %v240 = vunpack.c.l.b16 %v132
    %v241 = vunpack.c.l.b16 %v133
    %v242 = vunpack.c.l.b16 %v134
    %v243 = vunpack.c.l.b16 %v135
    %v244 = vpack.c.b16 %v229, %v228
    %v245 = vpack.c.b16 %v231, %v230
    %v246 = vpack.c.b16 %v233, %v232
    %v247 = vpack.c.b16 %v235, %v234
    %v248 = vpack.c.b16 %v237, %v236
    %v249 = vpack.c.b16 %v239, %v238
    %v250 = vpack.c.b16 %v241, %v240
    %v251 = vpack.c.b16 %v243, %v242
    %260 = vmatprep.subr.bf16.mxu0 0
    %261 = vmatpush1.bf16.msra.mxu0 %v251
    %262 = vmatprep.subr.bf16.mxu0 0
    %263 = vmatpush1.bf16.msra.mxu0 %v250
    %264 = vmatprep.subr.bf16.mxu0 0
    %265 = vmatpush1.bf16.msra.mxu0 %v249
    %266 = vmatprep.subr.bf16.mxu0 0
    %267 = vmatpush1.bf16.msra.mxu0 %v248
    %268 = vmatprep.subr.bf16.mxu0 0
    %269 = vmatpush1.bf16.msra.mxu0 %v247
    %270 = vmatprep.subr.bf16.mxu0 0
    %271 = vmatpush1.bf16.msra.mxu0 %v246
    %272 = vmatprep.subr.bf16.mxu0 0
    %273 = vmatpush1.bf16.msra.mxu0 %v245
    %274 = vmatprep.subr.bf16.mxu0 0
    %275 = vmatpush1.bf16.msra.mxu0 %v244
    %276 = vmatprep.subr.bf16.mxu0 0
    %277 = vmatpush2.bf16.msra.mxu0 0
    %278 = vmatprep.subr.bf16.mxu0 0
    %279 = vmatpush2.bf16.msra.mxu0 0
    %280 = vmatprep.subr.bf16.mxu0 0
    %281 = vmatpush2.bf16.msra.mxu0 0
    %282 = vmatprep.subr.bf16.mxu0 0
    %283 = vmatpush2.bf16.msra.mxu0 0
    %284 = vmatprep.subr.bf16.mxu0 0
    %285 = vmatpush2.bf16.msra.mxu0 0
    %286 = vmatprep.subr.bf16.mxu0 0
    %287 = vmatpush2.bf16.msra.mxu0 0
    %288 = vmatprep.subr.bf16.mxu0 0
    %289 = vmatpush2.bf16.msra.mxu0 0
    %290 = vmatprep.subr.bf16.mxu0 0
    %291 = vmatpush2.bf16.msra.mxu0 0
    %292 = vmatprep.mubr.bf16.mxu0 0
    %293 = vmatmul.mubr.bf16.gmra.mxu0 %v186
    %v294 = vpop.f32.mrf.mxu0
    %v295 = vadd.f32 0.0, %v294
    %v296 = vpop.f32.mrf.mxu0
    %v297 = vpop.f32.mrf.mxu0
    %v298 = vadd.f32 0.0, %v297
    %v299 = vpop.f32.mrf.mxu0
    %300 = vmatprep.mubr.bf16.mxu0 0
    %301 = vmatmul.mubr.bf16.gmra.mxu0 %v187
    %v302 = vpop.f32.mrf.mxu0
    %v303 = vadd.f32 0.0, %v302
    %v304 = vpop.f32.mrf.mxu0
    %v305 = vpop.f32.mrf.mxu0
    %v306 = vadd.f32 0.0, %v305
    %v307 = vpop.f32.mrf.mxu0
    %308 = vmatprep.mubr.bf16.mxu0 0
    %309 = vmatmul.mubr.bf16.gmra.mxu0 %v188
    %v310 = vpop.f32.mrf.mxu0
    %v311 = vadd.f32 0.0, %v310
    %v312 = vpop.f32.mrf.mxu0
    %v313 = vpop.f32.mrf.mxu0
    %v314 = vadd.f32 0.0, %v313
    %v315 = vpop.f32.mrf.mxu0
    %316 = vmatprep.mubr.bf16.mxu0 0
    %317 = vmatmul.mubr.bf16.gmra.mxu0 %v189
    %v318 = vpop.f32.mrf.mxu0
    %v319 = vadd.f32 0.0, %v318
    %v320 = vpop.f32.mrf.mxu0
    %v321 = vpop.f32.mrf.mxu0
    %v322 = vadd.f32 0.0, %v321
    %v323 = vpop.f32.mrf.mxu0
    %324 = vmatprep.mubr.bf16.mxu0 0
    %325 = vmatmul.mubr.bf16.gmra.mxu0 %v190
    %v326 = vpop.f32.mrf.mxu0
    %v327 = vadd.f32 0.0, %v326
    %v328 = vpop.f32.mrf.mxu0
    %v329 = vpop.f32.mrf.mxu0
    %v330 = vadd.f32 0.0, %v329
    %v331 = vpop.f32.mrf.mxu0
    %332 = vmatprep.mubr.bf16.mxu0 0
    %333 = vmatmul.mubr.bf16.gmra.mxu0 %v191
    %v334 = vpop.f32.mrf.mxu0
    %v335 = vadd.f32 0.0, %v334
    %v336 = vpop.f32.mrf.mxu0
    %v337 = vpop.f32.mrf.mxu0
    %v338 = vadd.f32 0.0, %v337
    %v339 = vpop.f32.mrf.mxu0
    %340 = vmatprep.mubr.bf16.mxu0 0
    %341 = vmatmul.mubr.bf16.gmra.mxu0 %v192
    %v342 = vpop.f32.mrf.mxu0
    %v343 = vadd.f32 0.0, %v342
    %v344 = vpop.f32.mrf.mxu0
    %v345 = vpop.f32.mrf.mxu0
    %v346 = vadd.f32 0.0, %v345
    %v347 = vpop.f32.mrf.mxu0
    %348 = vmatprep.mubr.bf16.mxu0 0
    %349 = vmatmul.mubr.bf16.gmra.mxu0 %v193
    %v350 = vpop.f32.mrf.mxu0
    %v351 = vadd.f32 0.0, %v350
    %v352 = vpop.f32.mrf.mxu0
    %v353 = vpop.f32.mrf.mxu0
    %v354 = vadd.f32 0.0, %v353
    %v355 = vpop.f32.mrf.mxu0
    %356 = vmatprep.mubr.bf16.mxu0 0
    %357 = vmatmul.mubr.bf16.gmra.mxu0 %v194
    %v358 = vpop.f32.mrf.mxu0
    %v359 = vadd.f32 0.0, %v358
    %v360 = vpop.f32.mrf.mxu0
    %v361 = vpop.f32.mrf.mxu0
    %v362 = vadd.f32 0.0, %v361
    %v363 = vpop.f32.mrf.mxu0
    %364 = vmatprep.mubr.bf16.mxu0 0
    %365 = vmatmul.mubr.bf16.gmra.mxu0 %v195
    %v366 = vpop.f32.mrf.mxu0
    %v367 = vadd.f32 0.0, %v366
    %v368 = vpop.f32.mrf.mxu0
    %v369 = vpop.f32.mrf.mxu0
    %v370 = vadd.f32 0.0, %v369
    %v371 = vpop.f32.mrf.mxu0
    %372 = vmatprep.mubr.bf16.mxu0 0
    %373 = vmatmul.mubr.bf16.gmra.mxu0 %v196
    %v374 = vpop.f32.mrf.mxu0
    %v375 = vadd.f32 0.0, %v374
    %v376 = vpop.f32.mrf.mxu0
    %v377 = vpop.f32.mrf.mxu0
    %v378 = vadd.f32 0.0, %v377
    %v379 = vpop.f32.mrf.mxu0
    %380 = vmatprep.mubr.bf16.mxu0 0
    %381 = vmatmul.mubr.bf16.gmra.mxu0 %v197
    %v382 = vpop.f32.mrf.mxu0
    %v383 = vadd.f32 0.0, %v382
    %v384 = vpop.f32.mrf.mxu0
    %v385 = vpop.f32.mrf.mxu0
    %v386 = vadd.f32 0.0, %v385
    %v387 = vpop.f32.mrf.mxu0
    %388 = vmatprep.mubr.bf16.mxu0 0
    %389 = vmatmul.mubr.bf16.gmra.mxu0 %v198
    %v390 = vpop.f32.mrf.mxu0
    %v391 = vadd.f32 0.0, %v390
    %v392 = vpop.f32.mrf.mxu0
    %v393 = vpop.f32.mrf.mxu0
    %v394 = vpop.f32.mrf.mxu0
    %395 = vdwg.mxu0
    %v396 = vadd.f32 %v70, %v295
    %v397 = vadd.f32 %v71, %v298
    %v398 = vadd.f32 %v72, %v303
    %v399 = vadd.f32 %v73, %v306
    %v400 = vadd.f32 %v74, %v311
    %v401 = vadd.f32 %v75, %v314
    %v402 = vadd.f32 %v76, %v319
    %v403 = vadd.f32 %v77, %v322
    %v404 = vadd.f32 %v78, %v327
    %v405 = vadd.f32 %v79, %v330
    %v406 = vadd.f32 %v80, %v335
    %v407 = vadd.f32 %v81, %v338
    %v408 = vadd.f32 %v82, %v343
    %v409 = vadd.f32 %v83, %v346
    %v410 = vadd.f32 %v84, %v351
    %v411 = vadd.f32 %v85, %v354
    %v412 = vadd.f32 %v86, %v359
    %v413 = vadd.f32 %v87, %v362
    %v414 = vadd.f32 %v88, %v367
    %v415 = vadd.f32 %v89, %v370
    %v416 = vadd.f32 %v90, %v375
    %v417 = vadd.f32 %v91, %v378
    %v418 = vadd.f32 %v92, %v383
    %v419 = vadd.f32 %v93, %v386
    %v420 = vadd.f32 %v94, %v391
    %421 = vst [vmem:[#allocation2] sm:$0xff] %v396
    %422 = vst [vmem:[#allocation2 + $0x8] sm:$0xff] %v397
    %423 = vst [vmem:[#allocation2 + $0x10] sm:$0xff] %v398
    %424 = vst [vmem:[#allocation2 + $0x18] sm:$0xff] %v399
    %425 = vst [vmem:[#allocation2 + $0x20] sm:$0xff] %v400
    %426 = vst [vmem:[#allocation2 + $0x28] sm:$0xff] %v401
    %427 = vst [vmem:[#allocation2 + $0x30] sm:$0xff] %v402
    %428 = vst [vmem:[#allocation2 + $0x38] sm:$0xff] %v403
    %429 = vst [vmem:[#allocation2 + $0x40] sm:$0xff] %v404
    %430 = vst [vmem:[#allocation2 + $0x48] sm:$0xff] %v405
    %431 = vst [vmem:[#allocation2 + $0x50] sm:$0xff] %v406
    %432 = vst [vmem:[#allocation2 + $0x58] sm:$0xff] %v407
    %433 = vst [vmem:[#allocation2 + $0x60] sm:$0xff] %v408
    %434 = vst [vmem:[#allocation2 + $0x68] sm:$0xff] %v409
    %435 = vst [vmem:[#allocation2 + $0x70] sm:$0xff] %v410
    %436 = vst [vmem:[#allocation2 + $0x78] sm:$0xff] %v411
    %437 = vst [vmem:[#allocation2 + $0x80] sm:$0xff] %v412
    %438 = vst [vmem:[#allocation2 + $0x88] sm:$0xff] %v413
    %439 = vst [vmem:[#allocation2 + $0x90] sm:$0xff] %v414
    %440 = vst [vmem:[#allocation2 + $0x98] sm:$0xff] %v415
    %441 = vst [vmem:[#allocation2 + $0xa0] sm:$0xff] %v416
    %442 = vst [vmem:[#allocation2 + $0xa8] sm:$0xff] %v417
    %443 = vst [vmem:[#allocation2 + $0xb0] sm:$0xff] %v418
    %444 = vst [vmem:[#allocation2 + $0xb8] sm:$0xff] %v419
    %445 = vst [vmem:[#allocation2 + $0xc0] sm:$0xff] %v420
    // Predicated region
    $region22: #{tpu_custom_call.1} parent=1 // pred_check
      %p446 = pneg %p41
    $region23: #{tpu_custom_call.1} parent=1 // pred_check_branch
      %448 = sbr.rel (%p446) target = $region25
    $region24: #{tpu_custom_call.1} parent=1 // pred_region
      %v449 = vld [vmem:[#allocation2] sm:$0xff]
      %v450 = vld [vmem:[#allocation2 + $0x8] sm:$0xff]
      %v451 = vld [vmem:[#allocation2 + $0x10] sm:$0xff]
      %v452 = vld [vmem:[#allocation2 + $0x18] sm:$0xff]
      %v453 = vld [vmem:[#allocation2 + $0x20] sm:$0xff]
      %v454 = vld [vmem:[#allocation2 + $0x28] sm:$0xff]
      %v455 = vld [vmem:[#allocation2 + $0x30] sm:$0xff]
      %v456 = vld [vmem:[#allocation2 + $0x38] sm:$0xff]
      %v457 = vld [vmem:[#allocation2 + $0x40] sm:$0xff]
      %v458 = vld [vmem:[#allocation2 + $0x48] sm:$0xff]
      %v459 = vld [vmem:[#allocation2 + $0x50] sm:$0xff]
      %v460 = vld [vmem:[#allocation2 + $0x58] sm:$0xff]
      %v461 = vld [vmem:[#allocation2 + $0x60] sm:$0xff]
      %v462 = vld [vmem:[#allocation2 + $0x68] sm:$0xff]
      %v463 = vld [vmem:[#allocation2 + $0x70] sm:$0xff]
      %v464 = vld [vmem:[#allocation2 + $0x78] sm:$0xff]
      %v465 = vld [vmem:[#allocation2 + $0x80] sm:$0xff]
      %v466 = vld [vmem:[#allocation2 + $0x88] sm:$0xff]
      %v467 = vld [vmem:[#allocation2 + $0x90] sm:$0xff]
      %v468 = vld [vmem:[#allocation2 + $0x98] sm:$0xff]
      %v469 = vld [vmem:[#allocation2 + $0xa0] sm:$0xff]
      %v470 = vld [vmem:[#allocation2 + $0xa8] sm:$0xff]
      %v471 = vld [vmem:[#allocation2 + $0xb0] sm:$0xff]
      %v472 = vld [vmem:[#allocation2 + $0xb8] sm:$0xff]
      %v473 = vld [vmem:[#allocation2 + $0xc0] sm:$0xff]
      %v474 = vpack.c.bf16 %v450, %v449
      %v475 = vpack.c.bf16 %v452, %v451
      %v476 = vpack.c.bf16 %v454, %v453
      %v477 = vpack.c.bf16 %v456, %v455
      %v478 = vpack.c.bf16 %v458, %v457
      %v479 = vpack.c.bf16 %v460, %v459
      %v480 = vpack.c.bf16 %v462, %v461
      %v481 = vpack.c.bf16 %v464, %v463
      %v482 = vpack.c.bf16 %v466, %v465
      %v483 = vpack.c.bf16 %v468, %v467
      %v484 = vpack.c.bf16 %v470, %v469
      %v485 = vpack.c.bf16 %v472, %v471
      %v486 = vpack.c.bf16 %v473, %v473
      %v500 = vunpack.c.l.b16 %v474
      %v501 = vunpack.c.h.b16 %v474
      %v502 = vunpack.c.l.b16 %v475
      %v503 = vunpack.c.h.b16 %v475
      %v504 = vunpack.c.l.b16 %v476
      %v505 = vunpack.c.h.b16 %v476
      %v506 = vunpack.c.l.b16 %v477
      %v507 = vunpack.c.h.b16 %v477
      %v508 = vunpack.c.l.b16 %v478
      %v509 = vunpack.c.h.b16 %v478
      %v510 = vunpack.c.l.b16 %v479
      %v511 = vunpack.c.h.b16 %v479
      %v512 = vunpack.c.l.b16 %v480
      %v513 = vunpack.c.h.b16 %v480
      %v514 = vunpack.c.l.b16 %v481
      %v515 = vunpack.c.h.b16 %v481
      %v516 = vunpack.c.l.b16 %v482
      %v517 = vunpack.c.h.b16 %v482
      %v518 = vunpack.c.l.b16 %v483
      %v519 = vunpack.c.h.b16 %v483
      %v520 = vunpack.c.l.b16 %v484
      %v521 = vunpack.c.h.b16 %v484
      %v522 = vunpack.c.l.b16 %v485
      %v523 = vunpack.c.h.b16 %v485
      %v524 = vunpack.c.l.b16 %v486
      %v525 = vpack.c.b16 %v500, %v500
      %v526 = vpack.c.b16 %v501, %v501
      %v527 = vpack.c.b16 %v502, %v502
      %v528 = vpack.c.b16 %v503, %v503
      %v529 = vpack.c.b16 %v504, %v504
      %v530 = vpack.c.b16 %v505, %v505
      %v531 = vpack.c.b16 %v506, %v506
      %v532 = vpack.c.b16 %v507, %v507
      %v533 = vpack.c.b16 %v508, %v508
      %v534 = vpack.c.b16 %v509, %v509
      %v535 = vpack.c.b16 %v510, %v510
      %v536 = vpack.c.b16 %v511, %v511
      %v537 = vpack.c.b16 %v512, %v512
      %v538 = vpack.c.b16 %v513, %v513
      %v539 = vpack.c.b16 %v514, %v514
      %v540 = vpack.c.b16 %v515, %v515
      %v541 = vpack.c.b16 %v516, %v516
      %v542 = vpack.c.b16 %v517, %v517
      %v543 = vpack.c.b16 %v518, %v518
      %v544 = vpack.c.b16 %v519, %v519
      %v545 = vpack.c.b16 %v520, %v520
      %v546 = vpack.c.b16 %v521, %v521
      %v547 = vpack.c.b16 %v522, %v522
      %v548 = vpack.c.b16 %v523, %v523
      %v549 = vpack.c.b16 %v524, %v524
      %575 = vst [vmem:[#allocation8] sm:$0xf] %v525
      %576 = vst [vmem:[#allocation8 + $0x4] sm:$0xf] %v526
      %577 = vst [vmem:[#allocation8 + $0x8] sm:$0xf] %v527
      %578 = vst [vmem:[#allocation8 + $0xc] sm:$0xf] %v528
      %579 = vst [vmem:[#allocation8 + $0x10] sm:$0xf] %v529
      %580 = vst [vmem:[#allocation8 + $0x14] sm:$0xf] %v530
      %581 = vst [vmem:[#allocation8 + $0x18] sm:$0xf] %v531
      %582 = vst [vmem:[#allocation8 + $0x1c] sm:$0xf] %v532
      %583 = vst [vmem:[#allocation8 + $0x20] sm:$0xf] %v533
      %584 = vst [vmem:[#allocation8 + $0x24] sm:$0xf] %v534
      %585 = vst [vmem:[#allocation8 + $0x28] sm:$0xf] %v535
      %586 = vst [vmem:[#allocation8 + $0x2c] sm:$0xf] %v536
      %587 = vst [vmem:[#allocation8 + $0x30] sm:$0xf] %v537
      %588 = vst [vmem:[#allocation8 + $0x34] sm:$0xf] %v538
      %589 = vst [vmem:[#allocation8 + $0x38] sm:$0xf] %v539
      %590 = vst [vmem:[#allocation8 + $0x3c] sm:$0xf] %v540
      %591 = vst [vmem:[#allocation8 + $0x40] sm:$0xf] %v541
      %592 = vst [vmem:[#allocation8 + $0x44] sm:$0xf] %v542
      %593 = vst [vmem:[#allocation8 + $0x48] sm:$0xf] %v543
      %594 = vst [vmem:[#allocation8 + $0x4c] sm:$0xf] %v544
      %595 = vst [vmem:[#allocation8 + $0x50] sm:$0xf] %v545
      %596 = vst [vmem:[#allocation8 + $0x54] sm:$0xf] %v546
      %597 = vst [vmem:[#allocation8 + $0x58] sm:$0xf] %v547
      %598 = vst [vmem:[#allocation8 + $0x5c] sm:$0xf] %v548
      %599 = vst [vmem:[#allocation8 + $0x60] sm:$0xf] %v549
    $region25: #{tpu_custom_call.1} parent=1 // pred_fallthru
      _
    // Predicated region
    $region26: #{tpu_custom_call.1} parent=1 // pred_check
      _
    $region27: #{tpu_custom_call.1} parent=1 // pred_check_branch
      %601 = sbr.rel (0) target = $region29
    $region28: #{tpu_custom_call.1} parent=1 // pred_region
      %s603 = ssub.s32 1600, 1600
      %604 = vsyncadd [#allocation5], %s603
      %s605 = sshll.u32 [#allocation8], 4
      %s606 = int_to_ptr.vmem [resolvable:$true] %s605
      %611 = dma.vmem_to_hbm [thread:$0]  %s606, 1600, %s2, [#allocation5], 64, 64, 4
    $region29: #{tpu_custom_call.1} parent=1 // pred_fallthru
      _
    // Predicated region
    $region30: #{tpu_custom_call.1} parent=1 // pred_check
      _
    $region31: #{tpu_custom_call.1} parent=1 // pred_check_branch
      %613 = sbr.rel (0) target = $region33
    $region32: #{tpu_custom_call.1} parent=1 // pred_region
      %614 = dma.done [#allocation5], 1600
    $region33: #{tpu_custom_call.1} parent=1 // pred_fallthru
      _
    %615 = vsyncpa [#allocation4], 1
    %616 = vsyncpa [#allocation7], 1
    %617 = vsyncpa [#allocation5], 1

</llo_original>
